<compile_context>
chip_gen: v7x
topology: tpu7x:2x2x1
jax: 0.10.0
libtpu: 0.0.40
codegen_flags: <defaults>
</compile_context>

<pallas_src>
import jax
import jax.numpy as jnp
from jax.experimental import pallas as pl
from jax.experimental.pallas import tpu as pltpu


def _round_up(x, m):
    return ((x + m - 1) // m) * m


def _pick_tile(total, desired, align):
    """Largest t <= desired that is a multiple of `align` and divides `total`.

    `total` must itself be a multiple of `align`, so t = align always works.
    """
    t = max(align, min(_round_up(desired, align), total))
    t = (t // align) * align
    while total % t != 0:
        t -= align
    return t


def _physical_vmem_bytes():
    """Per-core physical VMEM; conservative fallback if the query fails."""
    try:
        info = pltpu.get_tpu_info()
        v = int(getattr(info, "vmem_capacity_bytes", 0))
        if v > 0:
            return v
    except Exception:
        pass
    return 64 * 1024 * 1024   # v7x per-TensorCore VMEM (safe lower bound)


# -----------------------------------------------------------------------------
# Kernels
# -----------------------------------------------------------------------------
def _glu_resident_kernel(x_ref, wm_ref, wg_ref, bm_ref, bg_ref, o_ref):
    """Weights resident in VMEM; one fused dot+dot+epilogue per M tile."""
    x = x_ref[...]                                           # [tm, Kp] bf16
    main = jnp.dot(x, wm_ref[...], preferred_element_type=jnp.float32) + bm_ref[...]
    gate = jnp.dot(x, wg_ref[...], preferred_element_type=jnp.float32) + bg_ref[...]
    o_ref[...] = (main * jax.nn.sigmoid(gate)).astype(o_ref.dtype)


def _glu_tiled_kernel(x_ref, wm_ref, wg_ref, bm_ref, bg_ref, o_ref,
                      acc_main_ref, acc_gate_ref):
    """(M, N, K) grid; K is the last ("arbitrary") axis; f32 VMEM accumulators."""
    k = pl.program_id(2)

    @pl.when(k == 0)
    def _():
        acc_main_ref[...] = jnp.zeros_like(acc_main_ref)
        acc_gate_ref[...] = jnp.zeros_like(acc_gate_ref)

    x = x_ref[...]                                           # [tm, tk] bf16
    acc_main_ref[...] += jnp.dot(x, wm_ref[...],
                                 preferred_element_type=jnp.float32)
    acc_gate_ref[...] += jnp.dot(x, wg_ref[...],
                                 preferred_element_type=jnp.float32)

    @pl.when(k == pl.num_programs(2) - 1)
    def _():
        main = acc_main_ref[...] + bm_ref[...]               # f32 VPU epilogue
        gate = acc_gate_ref[...] + bg_ref[...]
        o_ref[...] = (main * jax.nn.sigmoid(gate)).astype(o_ref.dtype)


# -----------------------------------------------------------------------------
# Weight preparation (do once, reuse across forward calls)
# -----------------------------------------------------------------------------
def prepare_glu_params(w_main, b_main, w_gate, b_gate,
                       compute_dtype=jnp.bfloat16):
    """PyTorch-layout [out, in] weights -> padded [Kp, Np] compute_dtype weights
    plus (1, Np) f32 biases. Kp/Np are 128-multiples."""
    out_dim, in_dim = w_main.shape
    Kp = _round_up(in_dim, 128)
    Np = _round_up(out_dim, 128)

    def prep_w(w):
        w = jnp.transpose(w)                                  # [in, out]
        w = jnp.pad(w, ((0, Kp - in_dim), (0, Np - out_dim)))
        return w.astype(compute_dtype)

    def prep_b(b):
        return jnp.pad(b.astype(jnp.float32), (0, Np - out_dim))[None, :]

    return prep_w(w_main), prep_w(w_gate), prep_b(b_main), prep_b(b_gate)


# -----------------------------------------------------------------------------
# Forward pass from prepared weights
# -----------------------------------------------------------------------------
def glu_from_prepared(x, wm_p, wg_p, bm_p, bg_p, *, out_dim,
                      tm=512, tn=512, tk=2048, allow_resident=True,
                      compute_dtype=jnp.bfloat16):
    orig_shape = x.shape
    in_dim = orig_shape[-1]
    Kp, Np = wm_p.shape
    out_dtype = x.dtype
    out_bytes = jnp.dtype(out_dtype).itemsize

    M = 1
    for d in orig_shape[:-1]:
        M *= d
    x2 = x.reshape(M, in_dim)

    phys_vmem = _physical_vmem_bytes()
    vmem_limit = min((phys_vmem * 3) // 4, 100 * 1024 * 1024)
    budget = int(vmem_limit * 0.8)
    two_cores = phys_vmem <= 72 * 1024 * 1024   # v7x heuristic (64 MiB / TC, 2 TCs)

    # bf16 packs 16 sublanes per vreg -> keep M tiles / padding 16-aligned.
    M16 = _round_up(M, 16)
    tm = min(_round_up(tm, 16), M16)

    # ------------------------------------------------------------------
    # Weight-resident path: both [Kp, Np] weights live in VMEM for the whole
    # kernel (constant index_map -> single DMA); stream only x / out over M.
    # ------------------------------------------------------------------
    resident = False
    tm_res = tm
    if allow_resident:
        w_bytes = 2 * 2 * Kp * Np * 2            # 2 matrices, x2 buffers, bf16
        if w_bytes <= vmem_limit // 2:
            per_row = 2 * Kp * 2 + 2 * Np * out_bytes + 2 * Np * 4
            t = tm
            while t > 16 and w_bytes + t * per_row > budget:
                t = max(16, _round_up(t // 2, 16))
            if w_bytes + t * per_row <= budget:
                resident, tm_res = True, t

    if resident:
        tm = tm_res
        # Keep both v7x TensorCores busy when the parallel grid would be 1x1.
        if two_cores and M16 > 16 and _round_up(M, tm) // tm < 2:
            tm = _round_up(-(-M16 // 2), 16)
        Mp = _round_up(M, tm)

        x_p = x2
        if (Mp, Kp) != (M, in_dim):
            x_p = jnp.pad(x_p, ((0, Mp - M), (0, Kp - in_dim)))
        x_p = x_p.astype(compute_dtype)

        out = pl.pallas_call(
            _glu_resident_kernel,
            out_shape=jax.ShapeDtypeStruct((Mp, Np), out_dtype),
            grid_spec=pltpu.PrefetchScalarGridSpec(
                num_scalar_prefetch=0,
                grid=(Mp // tm,),
                in_specs=[
                    pl.BlockSpec((tm, Kp), lambda i: (i, 0)),   # x (streamed)
                    pl.BlockSpec((Kp, Np), lambda i: (0, 0)),   # W_main (resident)
                    pl.BlockSpec((Kp, Np), lambda i: (0, 0)),   # W_gate (resident)
                    pl.BlockSpec((1, Np), lambda i: (0, 0)),    # b_main
                    pl.BlockSpec((1, Np), lambda i: (0, 0)),    # b_gate
                ],
                out_specs=pl.BlockSpec((tm, Np), lambda i: (i, 0)),
            ),
            compiler_params=pltpu.CompilerParams(
                dimension_semantics=("parallel",),
                vmem_limit_bytes=vmem_limit,
            ),
        )(x_p, wm_p, wg_p, bm_p, bg_p)
        return out[:M, :out_dim].reshape(*orig_shape[:-1], out_dim)

    # ------------------------------------------------------------------
    # Tiled (M, N, K) path for weights too large to stay resident.
    # ------------------------------------------------------------------
    tn = _pick_tile(Np, tn, 128)
    tk = _pick_tile(Kp, tk, 128)

    def tiled_bytes(tm_, tn_, tk_):
        return (2 * tm_ * tk_ * 2            # x tiles (bf16, double-buffered)
                + 2 * 2 * tk_ * tn_ * 2      # both weight tiles
                + 2 * tm_ * tn_ * out_bytes  # out tiles
                + 2 * tm_ * tn_ * 4)         # f32 accumulators

    while tiled_bytes(tm, tn, tk) > budget and tk > 128:
        tk = _pick_tile(Kp, tk // 2, 128)
    while tiled_bytes(tm, tn, tk) > budget and tn > 128:
        tn = _pick_tile(Np, tn // 2, 128)
    while tiled_bytes(tm, tn, tk) > budget and tm > 16:
        tm = max(16, _round_up(tm // 2, 16))

    if two_cores and M16 > 16 and (_round_up(M, tm) // tm) * (Np // tn) < 2:
        tm = _round_up(-(-M16 // 2), 16)
    Mp = _round_up(M, tm)

    x_p = x2
    if (Mp, Kp) != (M, in_dim):
        x_p = jnp.pad(x_p, ((0, Mp - M), (0, Kp - in_dim)))
    x_p = x_p.astype(compute_dtype)

    grid = (Mp // tm, Np // tn, Kp // tk)
    out = pl.pallas_call(
        _glu_tiled_kernel,
        out_shape=jax.ShapeDtypeStruct((Mp, Np), out_dtype),
        grid_spec=pltpu.PrefetchScalarGridSpec(
            num_scalar_prefetch=0,
            grid=grid,
            in_specs=[
                pl.BlockSpec((tm, tk), lambda i, j, k: (i, k)),   # x
                pl.BlockSpec((tk, tn), lambda i, j, k: (k, j)),   # W_main
                pl.BlockSpec((tk, tn), lambda i, j, k: (k, j)),   # W_gate
                pl.BlockSpec((1, tn), lambda i, j, k: (0, j)),    # b_main
                pl.BlockSpec((1, tn), lambda i, j, k: (0, j)),    # b_gate
            ],
            out_specs=pl.BlockSpec((tm, tn), lambda i, j, k: (i, j)),
            scratch_shapes=[pltpu.VMEM((tm, tn), jnp.float32),    # acc main
                            pltpu.VMEM((tm, tn), jnp.float32)],   # acc gate
        ),
        compiler_params=pltpu.CompilerParams(
            dimension_semantics=("parallel", "parallel", "arbitrary"),
            vmem_limit_bytes=vmem_limit,
        ),
    )(x_p, wm_p, wg_p, bm_p, bg_p)
    return out[:M, :out_dim].reshape(*orig_shape[:-1], out_dim)


def glu_block_forward(x, w_main, b_main, w_gate, b_gate, **kwargs):
    """One-shot convenience wrapper (weight prep fused into the call)."""
    wm_p, wg_p, bm_p, bg_p = prepare_glu_params(w_main, b_main, w_gate, b_gate)
    return glu_from_prepared(x, wm_p, wg_p, bm_p, bg_p,
                             out_dim=w_main.shape[0], **kwargs)


def _glu_reference(x, w_main, b_main, w_gate, b_gate):
    main = jnp.einsum("...k,ok->...o", x, w_main) + b_main
    gate = jnp.einsum("...k,ok->...o", x, w_gate) + b_gate
    return main * jax.nn.sigmoid(gate)


# -----------------------------------------------------------------------------
# Example run
# -----------------------------------------------------------------------------
if __name__ == "__main__":
    key = jax.random.PRNGKey(0)

    def make_case(key, batch, seq, in_dim, out_dim, w_scale):
        kx, kwm, kbm, kwg, kbg = jax.random.split(key, 5)
        x = jax.random.normal(kx, (batch, seq, in_dim), jnp.float32)
        w_main = jax.random.normal(kwm, (out_dim, in_dim), jnp.float32) * w_scale
        b_main = jax.random.normal(kbm, (out_dim,), jnp.float32) * 0.1
        w_gate = jax.random.normal(kwg, (out_dim, in_dim), jnp.float32) * w_scale
        b_gate = jax.random.normal(kbg, (out_dim,), jnp.float32) * 0.1
        return x, w_main, b_main, w_gate, b_gate

    fwd = jax.jit(
        glu_from_prepared,
        static_argnames=("out_dim", "tm", "tn", "tk", "allow_resident"))

    # Case 1: small shapes implied by the module (batch=2, seq=8, 32 -> 64).
    k1, k2 = jax.random.split(key)
    args1 = make_case(k1, batch=2, seq=8, in_dim=32, out_dim=64, w_scale=0.1)
    x1, w1m, b1m, w1g, b1g = args1
    prep1 = prepare_glu_params(w1m, b1m, w1g, b1g)     # hoisted: done once
    out1 = fwd(x1, *prep1, out_dim=64)
    jax.block_until_ready(out1)
    assert out1.shape == (2, 8, 64)
    assert bool(jnp.all(jnp.isfinite(out1)))
    ref1 = _glu_reference(*args1)
    assert bool(jnp.allclose(out1, ref1, atol=5e-2, rtol=5e-2)), "case1 mismatch"

    # Case 2: larger shapes -> weight-resident path (weights DMA'd once).
    args2 = make_case(k2, batch=4, seq=128, in_dim=1024, out_dim=512, w_scale=0.05)
    x2_, w2m, b2m, w2g, b2g = args2
    prep2 = prepare_glu_params(w2m, b2m, w2g, b2g)     # hoisted: done once
    out2 = fwd(x2_, *prep2, out_dim=512)
    jax.block_until_ready(out2)
    assert out2.shape == (4, 128, 512)
    assert bool(jnp.all(jnp.isfinite(out2)))
    ref2 = _glu_reference(*args2)
    assert bool(jnp.allclose(out2, ref2, atol=1e-1, rtol=5e-2)), "case2 mismatch"

    # Case 3: force the tiled (M, N, K) path (K accumulation + pl.when epilogue)
    # on the same inputs; must match both the reference and the resident path.
    out3 = fwd(x2_, *prep2, out_dim=512, allow_resident=False,
               tm=256, tn=256, tk=512)
    jax.block_until_ready(out3)
    assert out3.shape == (4, 128, 512)
    assert bool(jnp.allclose(out3, ref2, atol=1e-1, rtol=5e-2)), "case3 mismatch"
    assert bool(jnp.allclose(out3, out2, atol=5e-2, rtol=5e-2)), "path mismatch"

    # One-shot convenience wrapper (prep fused in) should agree with cached path.
    out1b = jax.jit(glu_block_forward)(*args1)
    jax.block_until_ready(out1b)
    assert bool(jnp.allclose(out1b, out1, atol=1e-3, rtol=1e-3))

    print("KERNEL_OK")
</pallas_src>

<mosaic_0001>
module attributes {stable_mosaic.version = 11 : i64} {
  func.func @_glu_resident_kernel(%arg0: i32, %arg1: memref<16x128xbf16, #tpu.memory_space<vmem>>, %arg2: memref<128x128xbf16, #tpu.memory_space<vmem>>, %arg3: memref<128x128xbf16, #tpu.memory_space<vmem>>, %arg4: memref<1x128xf32, #tpu.memory_space<vmem>>, %arg5: memref<1x128xf32, #tpu.memory_space<vmem>>, %arg6: memref<16x128xf32, #tpu.memory_space<vmem>>) attributes {dimension_semantics = [#tpu.dimension_semantics<parallel>], iteration_bounds = array<i64: 1>, scalar_prefetch = 0 : i64, scratch_operands = 0 : i64, tpu.core_type = #tpu.core_type<tc>, window_params = [{transform_indices = @transform_0, window_bounds = array<i64: 16, 128>}, {pipeline_mode = #tpu.pipeline_mode<synchronous>, transform_indices = @transform_1, window_bounds = array<i64: 128, 128>}, {pipeline_mode = #tpu.pipeline_mode<synchronous>, transform_indices = @transform_2, window_bounds = array<i64: 128, 128>}, {pipeline_mode = #tpu.pipeline_mode<synchronous>, transform_indices = @transform_3, window_bounds = array<i64: 1, 128>}, {pipeline_mode = #tpu.pipeline_mode<synchronous>, transform_indices = @transform_4, window_bounds = array<i64: 1, 128>}, {transform_indices = @transform_5, window_bounds = array<i64: 16, 128>}]} {
    %c0 = arith.constant 0 : index
    %c0_0 = arith.constant 0 : index
    %0 = vector.load %arg1[%c0, %c0_0] : memref<16x128xbf16, #tpu.memory_space<vmem>>, vector<16x128xbf16>
    %c0_1 = arith.constant 0 : index
    %c0_2 = arith.constant 0 : index
    %1 = vector.load %arg2[%c0_1, %c0_2] : memref<128x128xbf16, #tpu.memory_space<vmem>>, vector<128x128xbf16>
    %cst = arith.constant dense<0.000000e+00> : vector<16x128xf32>
    %2 = tpu.matmul %0, %1, %cst {dimension_numbers = #tpu.dot_dimension_numbers<[1], [0], [0], [1], [0, 0, 1, 1], [], []>} : vector<16x128xbf16>, vector<128x128xbf16>, vector<16x128xf32> -> vector<16x128xf32>
    %c0_3 = arith.constant 0 : index
    %c0_4 = arith.constant 0 : index
    %3 = vector.load %arg4[%c0_3, %c0_4] : memref<1x128xf32, #tpu.memory_space<vmem>>, vector<1x128xf32>
    %4 = vector.broadcast %3 : vector<1x128xf32> to vector<16x128xf32>
    %5 = arith.addf %2, %4 : vector<16x128xf32>
    %c0_5 = arith.constant 0 : index
    %c0_6 = arith.constant 0 : index
    %6 = vector.load %arg3[%c0_5, %c0_6] : memref<128x128xbf16, #tpu.memory_space<vmem>>, vector<128x128xbf16>
    %cst_7 = arith.constant dense<0.000000e+00> : vector<16x128xf32>
    %7 = tpu.matmul %0, %6, %cst_7 {dimension_numbers = #tpu.dot_dimension_numbers<[1], [0], [0], [1], [0, 0, 1, 1], [], []>} : vector<16x128xbf16>, vector<128x128xbf16>, vector<16x128xf32> -> vector<16x128xf32>
    %c0_8 = arith.constant 0 : index
    %c0_9 = arith.constant 0 : index
    %8 = vector.load %arg5[%c0_8, %c0_9] : memref<1x128xf32, #tpu.memory_space<vmem>>, vector<1x128xf32>
    %9 = vector.broadcast %8 : vector<1x128xf32> to vector<16x128xf32>
    %10 = arith.addf %7, %9 : vector<16x128xf32>
    %11 = arith.negf %10 : vector<16x128xf32>
    %12 = math.exp %11 : vector<16x128xf32>
    %cst_10 = arith.constant 1.000000e+00 : f32
    %13 = vector.broadcast %cst_10 : f32 to vector<16x128xf32>
    %14 = arith.addf %13, %12 : vector<16x128xf32>
    %15 = arith.divf %13, %14 : vector<16x128xf32>
    %16 = arith.mulf %5, %15 : vector<16x128xf32>
    %c0_11 = arith.constant 0 : index
    %c0_12 = arith.constant 0 : index
    %17 = vector.load %arg6[%c0_11, %c0_12] : memref<16x128xf32, #tpu.memory_space<vmem>>, vector<16x128xf32>
    tpu.vector_store %arg6[%c0_11, %c0_12], %16 {strides = array<i32>} : memref<16x128xf32, #tpu.memory_space<vmem>>, vector<16x128xf32>,
    return
  }
  func.func @transform_0(%arg0: i32) -> (i32, i32) {
    %c0_i32 = arith.constant 0 : i32
    %c0_i32_0 = arith.constant 0 : i32
    return %arg0, %c0_i32 : i32, i32
  }
  func.func @transform_1(%arg0: i32) -> (i32, i32) {
    %c0_i32 = arith.constant 0 : i32
    %c0_i32_0 = arith.constant 0 : i32
    %c0_i32_1 = arith.constant 0 : i32
    return %c0_i32, %c0_i32_0 : i32, i32
  }
  func.func @transform_2(%arg0: i32) -> (i32, i32) {
    %c0_i32 = arith.constant 0 : i32
    %c0_i32_0 = arith.constant 0 : i32
    %c0_i32_1 = arith.constant 0 : i32
    return %c0_i32, %c0_i32_0 : i32, i32
  }
  func.func @transform_3(%arg0: i32) -> (i32, i32) {
    %c0_i32 = arith.constant 0 : i32
    %c0_i32_0 = arith.constant 0 : i32
    %c0_i32_1 = arith.constant 0 : i32
    return %c0_i32, %c0_i32_0 : i32, i32
  }
  func.func @transform_4(%arg0: i32) -> (i32, i32) {
    %c0_i32 = arith.constant 0 : i32
    %c0_i32_0 = arith.constant 0 : i32
    %c0_i32_1 = arith.constant 0 : i32
    return %c0_i32, %c0_i32_0 : i32, i32
  }
  func.func @transform_5(%arg0: i32) -> (i32, i32) {
    %c0_i32 = arith.constant 0 : i32
    %c0_i32_0 = arith.constant 0 : i32
    return %arg0, %c0_i32 : i32, i32
  }
}

</mosaic_0001>

<llo_original>
// kernel: glu_from_prepared.1
$region0: #{glu_from_prepared.1}
  #allocation0 [shape = 'u32[]', space=smem, size = 0x4, offset = 0x4, fixed_abs, tag = 'smem constant byte address 0x4 - core index']
  #allocation1 [shape = 'u32[144,128]{1,0:T(1,128)}', space=vmem, size = 0x12000, scoped, tag = 'internal scratch']
  %s0 = inlined_call_operand.vmem [shape: bf16[16,128], index: 0, kind: input, shape index: {}]
  %s1 = inlined_call_operand.hbm [shape: bf16[128,128], index: 1, kind: input, shape index: {}]
  %s2 = inlined_call_operand.hbm [shape: bf16[128,128], index: 2, kind: input, shape index: {}]
  %s3 = inlined_call_operand.vmem [shape: f32[1,128], index: 3, kind: input, shape index: {}]
  %s4 = inlined_call_operand.vmem [shape: f32[1,128], index: 4, kind: input, shape index: {}]
  %s5 = inlined_call_operand.vmem [shape: f32[16,128], index: 5, kind: output, shape index: {}]
  %s6 = sld [smem:[#allocation0]]
  $region38: #{glu_from_prepared.1} parent=0
    _
  %s8 = ssub.s32 1, %s6
  %s9 = scalar_select 0, %s8, %s6
  $region1: #{glu_from_prepared.1} parent=0
    #allocation2 [shape = 'u8[32768]{0}', space=vmem, size = 0x8000, scoped, tag = 'input window, operand 1, single buffered']
    #allocation3 [shape = 's32[1]{0}', space=sflag, size = 0x4, scoped, tag = 'scoped memory for glu_from_prepared.1']
    #allocation4 [shape = 'u8[32768]{0}', space=vmem, size = 0x8000, scoped, tag = 'input window, operand 2, single buffered']
    #allocation5 [shape = 's32[1]{0}', space=sflag, size = 0x4, scoped, tag = 'scoped memory for glu_from_prepared.1']
    %10 = vsyncpa [#allocation3], 0
    %11 = vsyncpa [#allocation5], 0
    // Predicated region
    $region2: #{glu_from_prepared.1} parent=1 // pred_check
      _
    $region3: #{glu_from_prepared.1} parent=1 // pred_check_branch
      %13 = sbr.rel (0) target = $region5
    $region4: #{glu_from_prepared.1} parent=1 // pred_region
      _
    $region5: #{glu_from_prepared.1} parent=1 // pred_fallthru
      _
    // Predicated region
    $region6: #{glu_from_prepared.1} parent=1 // pred_check
      _
    $region7: #{glu_from_prepared.1} parent=1 // pred_check_branch
      %15 = sbr.rel (0) target = $region9
    $region8: #{glu_from_prepared.1} parent=1 // pred_region
      %s17 = ssub.s32 1024, 1024
      %18 = vsyncadd [#allocation3], %s17
      %s19 = sshll.u32 [#allocation2], 4
      %s20 = int_to_ptr.vmem [resolvable:$true] %s19
      %25 = dma.hbm_to_vmem [thread:$0]  %s1, 1024, %s20, [#allocation3], 64, 64, 4
    $region9: #{glu_from_prepared.1} parent=1 // pred_fallthru
      _
    // Predicated region
    $region10: #{glu_from_prepared.1} parent=1 // pred_check
      _
    $region11: #{glu_from_prepared.1} parent=1 // pred_check_branch
      %27 = sbr.rel (0) target = $region13
    $region12: #{glu_from_prepared.1} parent=1 // pred_region
      %s29 = ssub.s32 1024, 1024
      %30 = vsyncadd [#allocation5], %s29
      %s31 = sshll.u32 [#allocation4], 4
      %s32 = int_to_ptr.vmem [resolvable:$true] %s31
      %37 = dma.hbm_to_vmem [thread:$0]  %s2, 1024, %s32, [#allocation5], 64, 64, 4
    $region13: #{glu_from_prepared.1} parent=1 // pred_fallthru
      _
    // Predicated region
    $region14: #{glu_from_prepared.1} parent=1 // pred_check
      _
    $region15: #{glu_from_prepared.1} parent=1 // pred_check_branch
      %39 = sbr.rel (0) target = $region17
    $region16: #{glu_from_prepared.1} parent=1 // pred_region
      _
    $region17: #{glu_from_prepared.1} parent=1 // pred_fallthru
      _
    // Predicated region
    $region18: #{glu_from_prepared.1} parent=1 // pred_check
      _
    $region19: #{glu_from_prepared.1} parent=1 // pred_check_branch
      %41 = sbr.rel (0) target = $region21
    $region20: #{glu_from_prepared.1} parent=1 // pred_region
      _
    $region21: #{glu_from_prepared.1} parent=1 // pred_fallthru
      _
    // Predicated region
    $region22: #{glu_from_prepared.1} parent=1 // pred_check
      _
    $region23: #{glu_from_prepared.1} parent=1 // pred_check_branch
      %43 = sbr.rel (0) target = $region25
    $region24: #{glu_from_prepared.1} parent=1 // pred_region
      %44 = dma.done [#allocation3], 1024
    $region25: #{glu_from_prepared.1} parent=1 // pred_fallthru
      _
    // Predicated region
    $region26: #{glu_from_prepared.1} parent=1 // pred_check
      _
    $region27: #{glu_from_prepared.1} parent=1 // pred_check_branch
      %46 = sbr.rel (0) target = $region29
    $region28: #{glu_from_prepared.1} parent=1 // pred_region
      %47 = dma.done [#allocation5], 1024
    $region29: #{glu_from_prepared.1} parent=1 // pred_fallthru
      _
    %v49 = vld [vmem:[%s0] sm:$0xf]
    %v50 = vld [vmem:[%s0 + $0x4] sm:$0xf]
    %v51 = vld [vmem:[#allocation2] sm:$0xf]
    %v52 = vld [vmem:[#allocation2 + $0x4] sm:$0xf]
    %v53 = vld [vmem:[#allocation2 + $0x8] sm:$0xf]
    %v54 = vld [vmem:[#allocation2 + $0xc] sm:$0xf]
    %v55 = vld [vmem:[#allocation2 + $0x10] sm:$0xf]
    %v56 = vld [vmem:[#allocation2 + $0x14] sm:$0xf]
    %v57 = vld [vmem:[#allocation2 + $0x18] sm:$0xf]
    %v58 = vld [vmem:[#allocation2 + $0x1c] sm:$0xf]
    %v59 = vld [vmem:[#allocation2 + $0x20] sm:$0xf]
    %v60 = vld [vmem:[#allocation2 + $0x24] sm:$0xf]
    %v61 = vld [vmem:[#allocation2 + $0x28] sm:$0xf]
    %v62 = vld [vmem:[#allocation2 + $0x2c] sm:$0xf]
    %v63 = vld [vmem:[#allocation2 + $0x30] sm:$0xf]
    %v64 = vld [vmem:[#allocation2 + $0x34] sm:$0xf]
    %v65 = vld [vmem:[#allocation2 + $0x38] sm:$0xf]
    %v66 = vld [vmem:[#allocation2 + $0x3c] sm:$0xf]
    %v67 = vld [vmem:[%s3] sm:$0x1]
    %v69 = vlaneseq
    %v70 = vshrl.u32 %v69, 7
    %v71 = vsub.s32 0, %v70
    %v72 = vrot.slane %v67, %v71
    %v76 = vunpack.c.l.b16 %v49
    %v77 = vunpack.c.l.b16 %v50
    %v78 = vpack.c.b16 %v77, %v76
    %v96 = vunpack.c.l.b16 %v51
    %v97 = vunpack.c.l.b16 %v52
    %v98 = vunpack.c.l.b16 %v53
    %v99 = vunpack.c.l.b16 %v54
    %v100 = vunpack.c.l.b16 %v55
    %v101 = vunpack.c.l.b16 %v56
    %v102 = vunpack.c.l.b16 %v57
    %v103 = vunpack.c.l.b16 %v58
    %v104 = vunpack.c.l.b16 %v59
    %v105 = vunpack.c.l.b16 %v60
    %v106 = vunpack.c.l.b16 %v61
    %v107 = vunpack.c.l.b16 %v62
    %v108 = vunpack.c.l.b16 %v63
    %v109 = vunpack.c.l.b16 %v64
    %v110 = vunpack.c.l.b16 %v65
    %v111 = vunpack.c.l.b16 %v66
    %v112 = vpack.c.b16 %v97, %v96
    %v113 = vpack.c.b16 %v99, %v98
    %v114 = vpack.c.b16 %v101, %v100
    %v115 = vpack.c.b16 %v103, %v102
    %v116 = vpack.c.b16 %v105, %v104
    %v117 = vpack.c.b16 %v107, %v106
    %v118 = vpack.c.b16 %v109, %v108
    %v119 = vpack.c.b16 %v111, %v110
    %128 = vmatprep.subr.bf16.mxu0 0
    %129 = vmatpush1.bf16.msra.mxu0 %v112
    %130 = vmatprep.subr.bf16.mxu0 0
    %131 = vmatpush1.bf16.msra.mxu0 %v113
    %132 = vmatprep.subr.bf16.mxu0 0
    %133 = vmatpush1.bf16.msra.mxu0 %v114
    %134 = vmatprep.subr.bf16.mxu0 0
    %135 = vmatpush1.bf16.msra.mxu0 %v115
    %136 = vmatprep.subr.bf16.mxu0 0
    %137 = vmatpush1.bf16.msra.mxu0 %v116
    %138 = vmatprep.subr.bf16.mxu0 0
    %139 = vmatpush1.bf16.msra.mxu0 %v117
    %140 = vmatprep.subr.bf16.mxu0 0
    %141 = vmatpush1.bf16.msra.mxu0 %v118
    %142 = vmatprep.subr.bf16.mxu0 0
    %143 = vmatpush1.bf16.msra.mxu0 %v119
    %144 = vmatprep.subr.bf16.mxu0 0
    %145 = vmatpush1.bf16.msra.mxu0 0
    %146 = vmatprep.subr.bf16.mxu0 0
    %147 = vmatpush1.bf16.msra.mxu0 0
    %148 = vmatprep.subr.bf16.mxu0 0
    %149 = vmatpush1.bf16.msra.mxu0 0
    %150 = vmatprep.subr.bf16.mxu0 0
    %151 = vmatpush1.bf16.msra.mxu0 0
    %152 = vmatprep.subr.bf16.mxu0 0
    %153 = vmatpush1.bf16.msra.mxu0 0
    %154 = vmatprep.subr.bf16.mxu0 0
    %155 = vmatpush1.bf16.msra.mxu0 0
    %156 = vmatprep.subr.bf16.mxu0 0
    %157 = vmatpush1.bf16.msra.mxu0 0
    %158 = vmatprep.subr.bf16.mxu0 0
    %159 = vmatpush1.bf16.msra.mxu0 0
    %160 = vmatprep.mubr.bf16.mxu0 0
    %161 = vmatmul.mubr.bf16.gmra.mrb[0].mxu0 %v78
    %v162 = vpop.f32.mrb[0].mxu0
    %v163 = vadd.f32 %v72, %v162
    %v164 = vpop.f32.mrb[0].mxu0
    %v165 = vpop.f32.mrb[0].mxu0
    %v166 = vadd.f32 %v72, %v165
    %v167 = vpop.f32.mrb[0].mxu0
    %168 = vdwg.mxu0
    %v169 = vld [vmem:[#allocation4] sm:$0xf]
    %v170 = vld [vmem:[#allocation4 + $0x4] sm:$0xf]
    %v171 = vld [vmem:[#allocation4 + $0x8] sm:$0xf]
    %v172 = vld [vmem:[#allocation4 + $0xc] sm:$0xf]
    %v173 = vld [vmem:[#allocation4 + $0x10] sm:$0xf]
    %v174 = vld [vmem:[#allocation4 + $0x14] sm:$0xf]
    %v175 = vld [vmem:[#allocation4 + $0x18] sm:$0xf]
    %v176 = vld [vmem:[#allocation4 + $0x1c] sm:$0xf]
    %v177 = vld [vmem:[#allocation4 + $0x20] sm:$0xf]
    %v178 = vld [vmem:[#allocation4 + $0x24] sm:$0xf]
    %v179 = vld [vmem:[#allocation4 + $0x28] sm:$0xf]
    %v180 = vld [vmem:[#allocation4 + $0x2c] sm:$0xf]
    %v181 = vld [vmem:[#allocation4 + $0x30] sm:$0xf]
    %v182 = vld [vmem:[#allocation4 + $0x34] sm:$0xf]
    %v183 = vld [vmem:[#allocation4 + $0x38] sm:$0xf]
    %v184 = vld [vmem:[#allocation4 + $0x3c] sm:$0xf]
    %v185 = vld [vmem:[%s4] sm:$0x1]
    %v187 = vlaneseq
    %v188 = vshrl.u32 %v187, 7
    %v189 = vsub.s32 0, %v188
    %v190 = vrot.slane %v185, %v189
    %v208 = vunpack.c.l.b16 %v169
    %v209 = vunpack.c.l.b16 %v170
    %v210 = vunpack.c.l.b16 %v171
    %v211 = vunpack.c.l.b16 %v172
    %v212 = vunpack.c.l.b16 %v173
    %v213 = vunpack.c.l.b16 %v174
    %v214 = vunpack.c.l.b16 %v175
    %v215 = vunpack.c.l.b16 %v176
    %v216 = vunpack.c.l.b16 %v177
    %v217 = vunpack.c.l.b16 %v178
    %v218 = vunpack.c.l.b16 %v179
    %v219 = vunpack.c.l.b16 %v180
    %v220 = vunpack.c.l.b16 %v181
    %v221 = vunpack.c.l.b16 %v182
    %v222 = vunpack.c.l.b16 %v183
    %v223 = vunpack.c.l.b16 %v184
    %v224 = vpack.c.b16 %v209, %v208
    %v225 = vpack.c.b16 %v211, %v210
    %v226 = vpack.c.b16 %v213, %v212
    %v227 = vpack.c.b16 %v215, %v214
    %v228 = vpack.c.b16 %v217, %v216
    %v229 = vpack.c.b16 %v219, %v218
    %v230 = vpack.c.b16 %v221, %v220
    %v231 = vpack.c.b16 %v223, %v222
    %240 = vmatprep.subr.bf16.mxu0 0
    %241 = vmatpush1.bf16.msra.mxu0 %v224
    %242 = vmatprep.subr.bf16.mxu0 0
    %243 = vmatpush1.bf16.msra.mxu0 %v225
    %244 = vmatprep.subr.bf16.mxu0 0
    %245 = vmatpush1.bf16.msra.mxu0 %v226
    %246 = vmatprep.subr.bf16.mxu0 0
    %247 = vmatpush1.bf16.msra.mxu0 %v227
    %248 = vmatprep.subr.bf16.mxu0 0
    %249 = vmatpush1.bf16.msra.mxu0 %v228
    %250 = vmatprep.subr.bf16.mxu0 0
    %251 = vmatpush1.bf16.msra.mxu0 %v229
    %252 = vmatprep.subr.bf16.mxu0 0
    %253 = vmatpush1.bf16.msra.mxu0 %v230
    %254 = vmatprep.subr.bf16.mxu0 0
    %255 = vmatpush1.bf16.msra.mxu0 %v231
    %256 = vmatprep.subr.bf16.mxu0 0
    %257 = vmatpush1.bf16.msra.mxu0 0
    %258 = vmatprep.subr.bf16.mxu0 0
    %259 = vmatpush1.bf16.msra.mxu0 0
    %260 = vmatprep.subr.bf16.mxu0 0
    %261 = vmatpush1.bf16.msra.mxu0 0
    %262 = vmatprep.subr.bf16.mxu0 0
    %263 = vmatpush1.bf16.msra.mxu0 0
    %264 = vmatprep.subr.bf16.mxu0 0
    %265 = vmatpush1.bf16.msra.mxu0 0
    %266 = vmatprep.subr.bf16.mxu0 0
    %267 = vmatpush1.bf16.msra.mxu0 0
    %268 = vmatprep.subr.bf16.mxu0 0
    %269 = vmatpush1.bf16.msra.mxu0 0
    %270 = vmatprep.subr.bf16.mxu0 0
    %271 = vmatpush1.bf16.msra.mxu0 0
    %272 = vmatprep.mubr.bf16.mxu0 0
    %273 = vmatmul.mubr.bf16.gmra.mrb[0].mxu0 %v78
    %v274 = vpop.f32.mrb[0].mxu0
    %v275 = vadd.f32 %v190, %v274
    %v276 = vpop.f32.mrb[0].mxu0
    %v277 = vpop.f32.mrb[0].mxu0
    %v278 = vadd.f32 %v190, %v277
    %v279 = vpop.f32.mrb[0].mxu0
    %280 = vdwg.mxu0
    %v281 = vxor.u32 %v275, 2147483648
    %v282 = vxor.u32 %v278, 2147483648
    %v283 = vmul.f32 %v281, 1.442695
    %v284 = vpow.pop %v283
    %v285 = vmul.f32 %v282, 1.442695
    %v286 = vpow.pop %v285
    %v287 = vadd.f32 %v284, 1.0
    %v288 = vadd.f32 %v286, 1.0
    %v289 = vrcp.pop %v287
    %v290 = vmul.f32 1.0, %v289
    %v291 = vrcp.pop %v288
    %v292 = vmul.f32 1.0, %v291
    %v293 = vmul.f32 %v163, %v290
    %v294 = vmul.f32 %v166, %v292
    %295 = vst [vmem:[%s5] sm:$0xff] %v293
    %296 = vst [vmem:[%s5 + $0x8] sm:$0xff] %v294
    // Predicated region
    $region30: #{glu_from_prepared.1} parent=1 // pred_check
      _
    $region31: #{glu_from_prepared.1} parent=1 // pred_check_branch
      %298 = sbr.rel (0) target = $region33
    $region32: #{glu_from_prepared.1} parent=1 // pred_region
      _
    $region33: #{glu_from_prepared.1} parent=1 // pred_fallthru
      _
    // Predicated region
    $region34: #{glu_from_prepared.1} parent=1 // pred_check
      _
    $region35: #{glu_from_prepared.1} parent=1 // pred_check_branch
      %300 = sbr.rel (0) target = $region37
    $region36: #{glu_from_prepared.1} parent=1 // pred_region
      _
    $region37: #{glu_from_prepared.1} parent=1 // pred_fallthru
      _
    %301 = vsyncpa [#allocation3], 1
    %302 = vsyncpa [#allocation5], 1

</llo_original>
